<compile_context>
chip_gen: v7x
topology: tpu7x:2x2x1
jax: 0.10.0
libtpu: 0.0.40
codegen_flags: <defaults>
</compile_context>

<pallas_src>
import functools

import jax
import jax.numpy as jnp
from jax.experimental import pallas as pl
from jax.experimental.pallas import tpu as pltpu


def _tpu_flavor():
    """Returns (bf16_compute, multicore_grid, vmem_limit_bytes)."""
    kind = ""
    try:
        dev = jax.devices()[0]
        if dev.platform == "tpu":
            kind = dev.device_kind.lower()
    except Exception:
        pass
    is_v7 = ("v7" in kind) or ("7x" in kind)
    bf16_compute = is_v7 or ("v6" in kind)            # bf16 VALU/EUP: v6e+/v7x only
    multicore = is_v7 or ("v4" in kind) or ("v5p" in kind)
    vmem_limit = (44 if is_v7 else 64) * 1024 * 1024  # v7x has 64 MiB VMEM per TC
    return bf16_compute, multicore, vmem_limit


def _pick_tile(N, C, P, *, vmem_budget_bytes, max_tile=8192):
    """Largest lane tile (multiple of 128) whose pipelined footprint fits the
    VMEM budget.  Accounts for sublane padding of the small C / N axes."""
    c_pad = ((C + 7) // 8) * 8
    n_pad = ((N + 7) // 8) * 8
    p_ceil = max(128, ((P + 127) // 128) * 128)
    tile, best = 128, 128
    while tile <= max_tile:
        # double-buffered f32 logits + i32 labels input blocks, plus ~5 f32
        # (N, C_pad, tile) compute temporaries live inside the body.
        inputs = 2 * (N * c_pad * tile * 4 + n_pad * tile * 4)
        temps = 5 * N * c_pad * tile * 4
        if inputs + temps <= vmem_budget_bytes:
            best = tile
        tile *= 2
    return min(best, p_ceil)


def _ohem_sum_kernel(pred_ref, label_ref, stats_ref, *,
                     total_p, tiles_per_chunk, compute_dtype):
    """Accumulate the sum of per-pixel cross-entropy over one lane tile.

    pred_ref  : (N, C, T)   logits tile, streamed in its HBM dtype (f32)
    label_ref : (N, T)      i32 labels tile
    stats_ref : (1, N, 128) f32 chunk accumulator (lane 0 read by the wrapper)
    """
    c = pl.program_id(0)
    t = pl.program_id(1)

    @pl.when(t == 0)
    def _():
        stats_ref[...] = jnp.zeros_like(stats_ref)

    x = pred_ref[...]                                  # (N, C, T)
    labels = label_ref[...]                            # (N, T)
    _, n_cls, tt = x.shape

    # bf16 VALU/EUP math on v6e/v7x, f32 on v5e.  Sums accumulate in f32.
    if x.dtype != compute_dtype:
        x = x.astype(compute_dtype)

    # Softmax CE on the max-shifted tensor (the max term cancels):
    #   ce = log(sum_c exp(x_c - m)) - (x_label - m)
    m = jnp.max(x, axis=1, keepdims=True)              # (N, 1, T)
    shifted = x - m                                    # (N, C, T), <= 0

    # (1, C, 1) class iota broadcast against the labels (no (N,C,T) iota).
    c_iota = jax.lax.broadcasted_iota(jnp.int32, (1, n_cls, 1), 1)
    onehot = c_iota == labels[:, None, :]              # (N, C, T) bool

    denom = jnp.sum(jnp.exp(shifted), axis=1, dtype=jnp.float32)        # (N, T)
    true_shift = jnp.sum(jnp.where(onehot, shifted, 0), axis=1,
                         dtype=jnp.float32)                             # (N, T)
    # NOTE: labels outside [0, C) would silently gather 0 here; inputs are
    # assumed to be valid class indices (as in the PyTorch reference).
    ce = jnp.log(denom) - true_shift                                    # (N, T)

    # Ragged spatial tail handled in-kernel: mask lanes whose global pixel
    # index is >= H*W.  jnp.where also shields the sums from NaN/inf that
    # garbage logits in the OOB region of the boundary block could produce.
    block = c * tiles_per_chunk + t
    lane = jax.lax.broadcasted_iota(jnp.int32, (1, tt), 1)
    valid = (block * tt + lane) < total_p              # (1, T), broadcasts over N

    loss_sum = jnp.sum(jnp.where(valid, ce, 0.0), axis=1, keepdims=True)  # (N, 1)
    stats_ref[...] = stats_ref[...] + loss_sum[None]   # same value on all lanes


@functools.partial(jax.jit, static_argnames=("tile", "num_chunks", "compute_dtype"))
def ohem_loss(y_pred, y_true, *, tile=None, num_chunks=None, compute_dtype=None):
    """Ohem().forward(y_pred, y_true) — returns a scalar f32 loss.

    Literal PyTorch semantics: the tuple-slice bug makes the hard-negative
    selection a no-op, so loss == mean per-pixel CE and num_samples == N*H*W.
    """
    N, C, H, W = y_pred.shape
    P = H * W

    bf16_compute, multicore, vmem_limit = _tpu_flavor()
    if compute_dtype is None:
        compute_dtype = jnp.bfloat16 if bf16_compute else jnp.float32
    if tile is None:
        tile = _pick_tile(N, C, P, vmem_budget_bytes=(vmem_limit * 3) // 4)

    num_tiles = pl.cdiv(P, tile)
    if num_chunks is None:
        num_chunks = 2 if (multicore and num_tiles >= 2) else 1
    # Keep every block at least partially in-bounds: num_chunks | num_tiles.
    num_chunks = max(1, min(num_chunks, num_tiles))
    while num_tiles % num_chunks:
        num_chunks -= 1
    tiles_per_chunk = num_tiles // num_chunks

    # Stream logits/labels in place — both reshapes are metadata-only; there
    # is no wrapper-side convert or pad pass.
    pred = y_pred.reshape(N, C, P)
    lab = y_true.astype(jnp.int32).reshape(N, P)

    kernel = functools.partial(
        _ohem_sum_kernel,
        total_p=P, tiles_per_chunk=tiles_per_chunk, compute_dtype=compute_dtype)

    cost = pl.CostEstimate(
        flops=6 * N * C * num_tiles * tile,
        transcendentals=N * C * num_tiles * tile + N * num_tiles * tile,
        bytes_accessed=(pred.dtype.itemsize * N * C * P + 4 * N * P
                        + 4 * num_chunks * N * 128),
    )

    stats = pl.pallas_call(
        kernel,
        out_shape=jax.ShapeDtypeStruct((num_chunks, N, 128), jnp.float32),
        grid_spec=pltpu.PrefetchScalarGridSpec(
            num_scalar_prefetch=0,
            grid=(num_chunks, tiles_per_chunk),
            in_specs=[
                pl.BlockSpec((N, C, tile),
                             lambda c, t: (0, 0, c * tiles_per_chunk + t)),
                pl.BlockSpec((N, tile),
                             lambda c, t: (0, c * tiles_per_chunk + t)),
            ],
            out_specs=pl.BlockSpec((1, N, 128), lambda c, t: (c, 0, 0)),
        ),
        compiler_params=pltpu.CompilerParams(
            dimension_semantics=("parallel", "arbitrary"),
            vmem_limit_bytes=vmem_limit,
        ),
        cost_estimate=cost,
    )(pred, lab)

    total_loss = jnp.sum(stats[:, :, 0])
    # num_samples == sum_i (Cp_i + Cn_i) == N*H*W exactly (see semantics note).
    return total_loss / (N * P)


def _ohem_loss_ref(y_pred, y_true):
    """Pure-JAX reference reproducing the literal PyTorch semantics."""
    N, C, H, W = y_pred.shape
    logits = y_pred.astype(jnp.float32).reshape(N, C, H * W)
    labels = y_true.astype(jnp.int32).reshape(N, H * W)
    logp = jax.nn.log_softmax(logits, axis=1)
    ce = -jnp.take_along_axis(logp, labels[:, None, :], axis=1)[:, 0, :]
    return jnp.sum(ce) / ce.size  # literal semantics == mean per-pixel CE


if __name__ == "__main__":
    key = jax.random.PRNGKey(0)
    k1, k2, k3, k4, k5, k6 = jax.random.split(key, 6)

    # --- check 1: canonical small shape, auto tile ---
    N, C, H, W = 2, 4, 16, 16
    y_pred = jax.random.normal(k1, (N, C, H, W), dtype=jnp.float32)
    y_true = jax.random.randint(k2, (N, H, W), 0, C, dtype=jnp.int32)
    ref = _ohem_loss_ref(y_pred, y_true)

    # exact-math path (forced f32 compute): tight check of the kernel math.
    loss_f32 = jax.block_until_ready(
        ohem_loss(y_pred, y_true, compute_dtype=jnp.float32))
    assert jnp.allclose(loss_f32, ref, rtol=1e-5, atol=1e-5), (loss_f32, ref)

    # default path (bf16 VALU/EUP math on v6e/v7x, f32 on v5e): loose check.
    loss = jax.block_until_ready(ohem_loss(y_pred, y_true))
    assert jnp.allclose(loss, ref, rtol=2e-2, atol=2e-2), (loss, ref)

    # --- check 2: ragged spatial size (P=323), forced small tile so the
    # in-kernel tail mask is exercised ---
    N2, C2, H2, W2 = 2, 5, 17, 19
    y_pred2 = jax.random.normal(k3, (N2, C2, H2, W2), dtype=jnp.float32)
    y_true2 = jax.random.randint(k4, (N2, H2, W2), 0, C2, dtype=jnp.int32)
    ref2 = _ohem_loss_ref(y_pred2, y_true2)
    loss2 = jax.block_until_ready(
        ohem_loss(y_pred2, y_true2, tile=128, compute_dtype=jnp.float32))
    assert jnp.allclose(loss2, ref2, rtol=1e-5, atol=1e-5), (loss2, ref2)

    # --- check 3: 2-chunk "parallel" accumulation path + ragged tail ---
    N3, C3, H3, W3 = 2, 4, 16, 31          # P=496 -> 4 tiles of 128
    y_pred3 = jax.random.normal(k5, (N3, C3, H3, W3), dtype=jnp.float32)
    y_true3 = jax.random.randint(k6, (N3, H3, W3), 0, C3, dtype=jnp.int32)
    ref3 = _ohem_loss_ref(y_pred3, y_true3)
    loss3 = jax.block_until_ready(
        ohem_loss(y_pred3, y_true3, tile=128, num_chunks=2,
                  compute_dtype=jnp.float32))
    assert jnp.allclose(loss3, ref3, rtol=1e-5, atol=1e-5), (loss3, ref3)

    print("KERNEL_OK")
</pallas_src>

<mosaic_0001>
module attributes {stable_mosaic.version = 11 : i64} {
  func.func @_ohem_sum_kernel(%arg0: i32, %arg1: i32, %arg2: memref<2x4x256xf32, #tpu.memory_space<vmem>>, %arg3: memref<2x256xi32, #tpu.memory_space<vmem>>, %arg4: memref<1x2x128xf32, #tpu.memory_space<vmem>>) attributes {dimension_semantics = [#tpu.dimension_semantics<parallel>, #tpu.dimension_semantics<arbitrary>], iteration_bounds = array<i64: 1, 1>, scalar_prefetch = 0 : i64, scratch_operands = 0 : i64, tpu.core_type = #tpu.core_type<tc>, window_params = [{transform_indices = @transform_0, window_bounds = array<i64: 2, 4, 256>}, {transform_indices = @transform_1, window_bounds = array<i64: 2, 256>}, {transform_indices = @transform_2, window_bounds = array<i64: 1, 2, 128>}]} {
    %c0_i32 = arith.constant 0 : i32
    %0 = arith.cmpi eq, %arg1, %c0_i32 : i32
    %1 = arith.extui %0 : i1 to i32
    %c0_i32_0 = arith.constant 0 : i32
    %2 = arith.cmpi ne, %1, %c0_i32_0 : i32
    scf.if %2 {
      %cst_17 = arith.constant 0.000000e+00 : f32
      %41 = vector.broadcast %cst_17 : f32 to vector<1x2x128xf32>
      %c0_18 = arith.constant 0 : index
      %c0_19 = arith.constant 0 : index
      %c0_20 = arith.constant 0 : index
      %42 = vector.load %arg4[%c0_18, %c0_19, %c0_20] : memref<1x2x128xf32, #tpu.memory_space<vmem>>, vector<1x2x128xf32>
      tpu.vector_store %arg4[%c0_18, %c0_19, %c0_20], %41 {strides = array<i32>} : memref<1x2x128xf32, #tpu.memory_space<vmem>>, vector<1x2x128xf32>,
    } else {
    }
    %c0 = arith.constant 0 : index
    %c0_1 = arith.constant 0 : index
    %c0_2 = arith.constant 0 : index
    %3 = vector.load %arg2[%c0, %c0_1, %c0_2] : memref<2x4x256xf32, #tpu.memory_space<vmem>>, vector<2x4x256xf32>
    %c0_3 = arith.constant 0 : index
    %c0_4 = arith.constant 0 : index
    %4 = vector.load %arg3[%c0_3, %c0_4] : memref<2x256xi32, #tpu.memory_space<vmem>>, vector<2x256xi32>
    %cst = arith.constant dense<0xFF800000> : vector<2x256xf32>
    %5 = vector.multi_reduction <maximumf>, %3, %cst [1] : vector<2x4x256xf32> to vector<2x256xf32>
    %6 = vector.shape_cast %5 : vector<2x256xf32> to vector<2x1x256xf32>
    %7 = vector.broadcast %6 : vector<2x1x256xf32> to vector<2x4x256xf32>
    %8 = arith.subf %3, %7 : vector<2x4x256xf32>
    %9 = tpu.iota {dimensions = array<i32: 1>} : vector<1x4x1xi32>
    %10 = vector.shape_cast %4 : vector<2x256xi32> to vector<2x1x256xi32>
    %11 = vector.broadcast %9 : vector<1x4x1xi32> to vector<2x4x256xi32>
    %12 = vector.broadcast %10 : vector<2x1x256xi32> to vector<2x4x256xi32>
    %13 = arith.cmpi eq, %11, %12 : vector<2x4x256xi32>
    %14 = math.exp %8 : vector<2x4x256xf32>
    %cst_5 = arith.constant dense<0.000000e+00> : vector<2x256xf32>
    %15 = vector.multi_reduction <add>, %14, %cst_5 [1] : vector<2x4x256xf32> to vector<2x256xf32>
    %c0_i32_6 = arith.constant 0 : i32
    %16 = arith.sitofp %c0_i32_6 : i32 to f32
    %17 = vector.broadcast %16 : f32 to vector<2x4x256xf32>
    %18 = arith.select %13, %8, %17 : vector<2x4x256xi1>, vector<2x4x256xf32>
    %cst_7 = arith.constant dense<0.000000e+00> : vector<2x256xf32>
    %19 = vector.multi_reduction <add>, %18, %cst_7 [1] : vector<2x4x256xf32> to vector<2x256xf32>
    %20 = math.log %15 : vector<2x256xf32>
    %21 = arith.subf %20, %19 : vector<2x256xf32>
    %c1_i32 = arith.constant 1 : i32
    %22 = arith.muli %arg0, %c1_i32 : i32
    %23 = arith.addi %22, %arg1 : i32
    %24 = tpu.iota {dimensions = array<i32: 1>} : vector<1x256xi32>
    %c256_i32 = arith.constant 256 : i32
    %25 = arith.muli %23, %c256_i32 : i32
    %26 = vector.broadcast %25 : i32 to vector<1x256xi32>
    %27 = arith.addi %26, %24 : vector<1x256xi32>
    %c256_i32_8 = arith.constant 256 : i32
    %28 = vector.broadcast %c256_i32_8 : i32 to vector<1x256xi32>
    %29 = arith.cmpi slt, %27, %28 : vector<1x256xi32>
    %cst_9 = arith.constant 0.000000e+00 : f32
    %30 = vector.shape_cast %29 : vector<1x256xi1> to vector<1x256xi1>
    %31 = vector.broadcast %30 : vector<1x256xi1> to vector<2x256xi1>
    %32 = vector.broadcast %cst_9 : f32 to vector<2x256xf32>
    %33 = arith.select %31, %21, %32 : vector<2x256xi1>, vector<2x256xf32>
    %cst_10 = arith.constant dense<0.000000e+00> : vector<2xf32>
    %34 = vector.multi_reduction <add>, %33, %cst_10 [1] : vector<2x256xf32> to vector<2xf32>
    %35 = vector.shape_cast %34 : vector<2xf32> to vector<2x1xf32>
    %c0_11 = arith.constant 0 : index
    %c0_12 = arith.constant 0 : index
    %c0_13 = arith.constant 0 : index
    %36 = vector.load %arg4[%c0_11, %c0_12, %c0_13] : memref<1x2x128xf32, #tpu.memory_space<vmem>>, vector<1x2x128xf32>
    %37 = vector.shape_cast %35 : vector<2x1xf32> to vector<1x2x1xf32>
    %38 = vector.broadcast %37 : vector<1x2x1xf32> to vector<1x2x128xf32>
    %39 = arith.addf %36, %38 : vector<1x2x128xf32>
    %c0_14 = arith.constant 0 : index
    %c0_15 = arith.constant 0 : index
    %c0_16 = arith.constant 0 : index
    %40 = vector.load %arg4[%c0_14, %c0_15, %c0_16] : memref<1x2x128xf32, #tpu.memory_space<vmem>>, vector<1x2x128xf32>
    tpu.vector_store %arg4[%c0_14, %c0_15, %c0_16], %39 {strides = array<i32>} : memref<1x2x128xf32, #tpu.memory_space<vmem>>, vector<1x2x128xf32>,
    return
  }
  func.func @transform_0(%arg0: i32, %arg1: i32) -> (i32, i32, i32) {
    %c1_i32 = arith.constant 1 : i32
    %0 = arith.muli %arg0, %c1_i32 : i32
    %1 = arith.addi %0, %arg1 : i32
    %c0_i32 = arith.constant 0 : i32
    %c0_i32_0 = arith.constant 0 : i32
    %c0_i32_1 = arith.constant 0 : i32
    return %c0_i32, %c0_i32_0, %1 : i32, i32, i32
  }
  func.func @transform_1(%arg0: i32, %arg1: i32) -> (i32, i32) {
    %c1_i32 = arith.constant 1 : i32
    %0 = arith.muli %arg0, %c1_i32 : i32
    %1 = arith.addi %0, %arg1 : i32
    %c0_i32 = arith.constant 0 : i32
    %c0_i32_0 = arith.constant 0 : i32
    return %c0_i32, %1 : i32, i32
  }
  func.func @transform_2(%arg0: i32, %arg1: i32) -> (i32, i32, i32) {
    %c0_i32 = arith.constant 0 : i32
    %c0_i32_0 = arith.constant 0 : i32
    %c0_i32_1 = arith.constant 0 : i32
    return %arg0, %c0_i32, %c0_i32_0 : i32, i32, i32
  }
}

</mosaic_0001>

<llo_original>
// kernel: ohem_loss.1
$region0: #{ohem_loss.1}
  #allocation0 [shape = 'u32[]', space=smem, size = 0x4, offset = 0x4, fixed_abs, tag = 'smem constant byte address 0x4 - core index']
  #allocation1 [shape = 'u32[144,128]{1,0:T(1,128)}', space=vmem, size = 0x12000, scoped, tag = 'internal scratch']
  %s0 = inlined_call_operand.hbm [shape: f32[2,4,256], index: 0, kind: input, shape index: {}]
  %s1 = inlined_call_operand.hbm [shape: s32[2,256], index: 1, kind: input, shape index: {}]
  %s2 = inlined_call_operand.hbm [shape: f32[1,2,128], index: 2, kind: output, shape index: {}]
  %s3 = sld [smem:[#allocation0]]
  $region30: #{ohem_loss.1} parent=0
    _
  %s5 = ssub.s32 1, %s3
  %s6 = scalar_select 0, %s5, %s3
  $region1: #{ohem_loss.1} parent=0
    #allocation2 [shape = 'u8[8192]{0}', space=vmem, size = 0x2000, scoped, tag = 'input window, operand 0, single buffered']
    #allocation3 [shape = 's32[1]{0}', space=sflag, size = 0x4, scoped, tag = 'scoped memory for ohem_loss.1']
    #allocation4 [shape = 's32[1]{0}', space=sflag, size = 0x4, scoped, tag = 'scoped memory for ohem_loss.1']
    #allocation5 [shape = 'u8[2048]{0}', space=vmem, size = 0x800, scoped, tag = 'input window, operand 1, single buffered']
    #allocation6 [shape = 's32[1]{0}', space=sflag, size = 0x4, scoped, tag = 'scoped memory for ohem_loss.1']
    #allocation7 [shape = 'u8[1024]{0}', space=vmem, size = 0x400, scoped, tag = 'output window, operand 0, single buffered']
    %7 = vsyncpa [#allocation3], 0
    %8 = vsyncpa [#allocation6], 0
    %9 = vsyncpa [#allocation4], 0
    // Predicated region
    $region2: #{ohem_loss.1} parent=1 // pred_check
      _
    $region3: #{ohem_loss.1} parent=1 // pred_check_branch
      %11 = sbr.rel (0) target = $region5
    $region4: #{ohem_loss.1} parent=1 // pred_region
      %s12 = sadd.s32 0, 0
      %s13 = smul.u32 2, %s12
      %s15 = ssub.s32 256, 256
      %16 = vsyncadd [#allocation3], %s15
      %s17 = smul.addr %s13, 64
      %s18 = scalar_lea.hbm %s0, %s17
      %s19 = sshll.u32 [#allocation2], 4
      %s20 = int_to_ptr.vmem [resolvable:$true] %s19
      %25 = dma.hbm_to_vmem [thread:$0]  %s18, 256, %s20, [#allocation3], 128, 128, 8
    $region5: #{ohem_loss.1} parent=1 // pred_fallthru
      _
    // Predicated region
    $region6: #{ohem_loss.1} parent=1 // pred_check
      _
    $region7: #{ohem_loss.1} parent=1 // pred_check_branch
      %27 = sbr.rel (0) target = $region9
    $region8: #{ohem_loss.1} parent=1 // pred_region
      %s28 = sadd.s32 0, 0
      %s29 = smul.u32 2, %s28
      %s31 = ssub.s32 64, 64
      %32 = vsyncadd [#allocation6], %s31
      %s33 = smul.addr %s29, 32
      %s34 = scalar_lea.hbm %s1, %s33
      %s36 = sshll.u32 [#allocation5], 4
      %s37 = int_to_ptr.vmem [resolvable:$true] %s36
      %39 = dma.hbm_to_vmem [thread:$0]  %s34, 64, %s37, [#allocation6]
    $region9: #{ohem_loss.1} parent=1 // pred_fallthru
      _
    // Predicated region
    $region10: #{ohem_loss.1} parent=1 // pred_check
      _
    $region11: #{ohem_loss.1} parent=1 // pred_check_branch
      %41 = sbr.rel (0) target = $region13
    $region12: #{ohem_loss.1} parent=1 // pred_region
      %42 = dma.done [#allocation3], 256
    $region13: #{ohem_loss.1} parent=1 // pred_fallthru
      _
    // Predicated region
    $region14: #{ohem_loss.1} parent=1 // pred_check
      _
    $region15: #{ohem_loss.1} parent=1 // pred_check_branch
      %44 = sbr.rel (0) target = $region17
    $region16: #{ohem_loss.1} parent=1 // pred_region
      %45 = dma.done [#allocation6], 64
    $region17: #{ohem_loss.1} parent=1 // pred_fallthru
      _
    %s46 = sadd.s32 0, 0
    %s47 = smul.u32 2, %s46
    %s48 = sadd.s32 0, 0
    %s49 = smul.u32 2, %s48
    %p50 = scmp.eq.s32.totalorder 0, 0
    // Predicated region
    $region18: #{ohem_loss.1} parent=1 // pred_check
      %p51 = pneg %p50
    $region19: #{ohem_loss.1} parent=1 // pred_check_branch
      %53 = sbr.rel (%p51) target = $region21
    $region20: #{ohem_loss.1} parent=1 // pred_region
      %54 = vst [vmem:[#allocation7] sm:$0x3] 0.0
    $region21: #{ohem_loss.1} parent=1 // pred_fallthru
      _
    %v55 = vld [vmem:[#allocation2] sm:$0xff]
    %v56 = vld [vmem:[#allocation2 + $0x8] sm:$0xff]
    %v57 = vld [vmem:[#allocation5] sm:$0xf]
    %v60 = vcombine.high %v55, %v55
    %v61 = vcombine.high %v56, %v56
    %vm64 = vcmask 1043456
    %v65 = vsel %vm64, %v55, -inf
    %v66 = vrot.slane %v65, 4
    %v67 = vmax.f32 %v65, %v66
    %v68 = vrot.slane %v67, 2
    %v69 = vmax.f32 %v67, %v68
    %v70 = vrot.slane %v69, 1
    %v71 = vmax.f32 %v69, %v70
    %v72 = vsel %vm64, %v60, -inf
    %v73 = vrot.slane %v72, 4
    %v74 = vmax.f32 %v72, %v73
    %v75 = vrot.slane %v74, 2
    %v76 = vmax.f32 %v74, %v75
    %v77 = vrot.slane %v76, 1
    %v78 = vmax.f32 %v76, %v77
    %v79 = vsel %vm64, %v56, -inf
    %v80 = vrot.slane %v79, 4
    %v81 = vmax.f32 %v79, %v80
    %v82 = vrot.slane %v81, 2
    %v83 = vmax.f32 %v81, %v82
    %v84 = vrot.slane %v83, 1
    %v85 = vmax.f32 %v83, %v84
    %v86 = vsel %vm64, %v61, -inf
    %v87 = vrot.slane %v86, 4
    %v88 = vmax.f32 %v86, %v87
    %v89 = vrot.slane %v88, 2
    %v90 = vmax.f32 %v88, %v89
    %v91 = vrot.slane %v90, 1
    %v92 = vmax.f32 %v90, %v91
    %v97 = vcombine.low %v71, %v78
    %v98 = vcombine.low %v85, %v92
    %v101 = vsub.f32 %v55, %v97
    %v102 = vsub.f32 %v56, %v98
    %v103 = vlaneseq
    %v104 = vshrl.u32 %v103, 7
    %v106 = vunpack.c.l.s4 1966171168
    %v107 = vunpack.c.0.s8 %v106
    %v108 = vlaneseq
    %v109 = vshrl.u32 %v108, 7
    %v110 = vsub.s32 %v107, %v109
    %v111 = vrot.slane %v57, %v110
    %v112 = vcombine.high %v111, %v111
    %v113 = vlaneseq
    %v114 = vshrl.u32 %v113, 7
    %v115 = vsub.s32 0, %v114
    %v116 = vrot.slane %v111, %v115
    %v117 = vlaneseq
    %v118 = vshrl.u32 %v117, 7
    %v119 = vsub.s32 1, %v118
    %v120 = vrot.slane %v111, %v119
    %v121 = vlaneseq
    %v122 = vshrl.u32 %v121, 7
    %v123 = vsub.s32 0, %v122
    %v124 = vrot.slane %v112, %v123
    %v125 = vlaneseq
    %v126 = vshrl.u32 %v125, 7
    %v127 = vsub.s32 1, %v126
    %v128 = vrot.slane %v112, %v127
    %vm129 = vcmp.eq.s32.totalorder %v104, %v116
    %vm130 = vcmp.eq.s32.totalorder %v104, %v120
    %vm131 = vcmp.eq.s32.totalorder %v104, %v124
    %vm132 = vcmp.eq.s32.totalorder %v104, %v128
    %v133 = vmul.f32 %v101, 1.442695
    %v134 = vpow.pop %v133
    %v135 = vmul.f32 %v102, 1.442695
    %v136 = vpow.pop %v135
    %v139 = vcombine.high %v134, %v134
    %v140 = vcombine.high %v136, %v136
    %v143 = vsel %vm64, %v134, 0.0
    %v144 = vrot.slane %v143, 4
    %v145 = vadd.f32 %v143, %v144
    %v146 = vrot.slane %v145, 2
    %v147 = vadd.f32 %v145, %v146
    %v148 = vrot.slane %v147, 1
    %v149 = vadd.f32 %v147, %v148
    %v150 = vsel %vm64, %v139, 0.0
    %v151 = vrot.slane %v150, 4
    %v152 = vadd.f32 %v150, %v151
    %v153 = vrot.slane %v152, 2
    %v154 = vadd.f32 %v152, %v153
    %v155 = vrot.slane %v154, 1
    %v156 = vadd.f32 %v154, %v155
    %v157 = vsel %vm64, %v136, 0.0
    %v158 = vrot.slane %v157, 4
    %v159 = vadd.f32 %v157, %v158
    %v160 = vrot.slane %v159, 2
    %v161 = vadd.f32 %v159, %v160
    %v162 = vrot.slane %v161, 1
    %v163 = vadd.f32 %v161, %v162
    %v164 = vsel %vm64, %v140, 0.0
    %v165 = vrot.slane %v164, 4
    %v166 = vadd.f32 %v164, %v165
    %v167 = vrot.slane %v166, 2
    %v168 = vadd.f32 %v166, %v167
    %v169 = vrot.slane %v168, 1
    %v170 = vadd.f32 %v168, %v169
    %v173 = vcombine.high %v101, %v101
    %v174 = vcombine.high %v102, %v102
    %v177 = vsel %vm129, %v101, 0.0
    %v178 = vsel %vm130, %v173, 0.0
    %v179 = vsel %vm131, %v102, 0.0
    %v180 = vsel %vm132, %v174, 0.0
    %v181 = vsel %vm64, %v177, 0.0
    %v182 = vrot.slane %v181, 4
    %v183 = vadd.f32 %v181, %v182
    %v184 = vrot.slane %v183, 2
    %v185 = vadd.f32 %v183, %v184
    %v186 = vrot.slane %v185, 1
    %v187 = vadd.f32 %v185, %v186
    %v188 = vsel %vm64, %v178, 0.0
    %v189 = vrot.slane %v188, 4
    %v190 = vadd.f32 %v188, %v189
    %v191 = vrot.slane %v190, 2
    %v192 = vadd.f32 %v190, %v191
    %v193 = vrot.slane %v192, 1
    %v194 = vadd.f32 %v192, %v193
    %v195 = vsel %vm64, %v179, 0.0
    %v196 = vrot.slane %v195, 4
    %v197 = vadd.f32 %v195, %v196
    %v198 = vrot.slane %v197, 2
    %v199 = vadd.f32 %v197, %v198
    %v200 = vrot.slane %v199, 1
    %v201 = vadd.f32 %v199, %v200
    %v202 = vsel %vm64, %v180, 0.0
    %v203 = vrot.slane %v202, 4
    %v204 = vadd.f32 %v202, %v203
    %v205 = vrot.slane %v204, 2
    %v206 = vadd.f32 %v204, %v205
    %v207 = vrot.slane %v206, 1
    %v208 = vadd.f32 %v206, %v207
    %v209 = vlog2.pop %v149
    %v210 = vmul.f32 %v209, 0.6931472
    %v211 = vlog2.pop %v156
    %v212 = vmul.f32 %v211, 0.6931472
    %v213 = vlog2.pop %v163
    %v214 = vmul.f32 %v213, 0.6931472
    %v215 = vlog2.pop %v170
    %v216 = vmul.f32 %v215, 0.6931472
    %v217 = vsub.f32 %v210, %v187
    %v218 = vsub.f32 %v212, %v194
    %v219 = vsub.f32 %v214, %v201
    %v220 = vsub.f32 %v216, %v208
    %s221 = sadd.s32 0, 0
    %v222 = vlaneseq
    %v223 = vand.u32 %v222, 127
    %v224 = vadd.s32 %v223, 128
    %s225 = smul.u32 %s221, 256
    %v226 = vstv %s225
    %v227 = vadd.s32 %v226, %v223
    %v228 = vadd.s32 %v226, %v224
    %vm229 = vcmp.lt.s32.totalorder %v227, 256
    %vm230 = vcmp.lt.s32.totalorder %v228, 256
    %v231 = vsel %vm229, 1, 0
    %v232 = vsel %vm230, 1, 0
    %vm233 = vcmp.eq.s32.totalorder %v231, 1
    %vm234 = vcmp.eq.s32.totalorder %v232, 1
    %vm239 = vcmask 1041409
    %v240 = vsel %vm239, %v219, %v217
    %v241 = vsel %vm239, %v220, %v218
    %v244 = vsel %vm233, %v240, 0.0
    %v245 = vsel %vm234, %v241, 0.0
    %vm246 = vcmask 1041408
    %v247 = vsel %vm246, %v244, 0.0
    %v248 = vsel %vm246, %v245, 0.0
    %v249 = vadd.f32 %v247, %v248
    %250 = vadd.xlane.f32.xlu0 %v249
    %v251 = vpop.xlane.xlu0 %250
    %v252 = vld [vmem:[#allocation7] sm:$0x3]
    %v253 = vadd.f32 %v252, %v251
    %254 = vst [vmem:[#allocation7] sm:$0x3] %v253
    // Predicated region
    $region22: #{ohem_loss.1} parent=1 // pred_check
      _
    $region23: #{ohem_loss.1} parent=1 // pred_check_branch
      %256 = sbr.rel (0) target = $region25
    $region24: #{ohem_loss.1} parent=1 // pred_region
      %s258 = ssub.s32 32, 32
      %259 = vsyncadd [#allocation4], %s258
      %s261 = sshll.u32 [#allocation7], 4
      %s262 = int_to_ptr.vmem [resolvable:$true] %s261
      %264 = dma.vmem_to_hbm [thread:$0]  %s262, 32, %s2, [#allocation4]
    $region25: #{ohem_loss.1} parent=1 // pred_fallthru
      _
    // Predicated region
    $region26: #{ohem_loss.1} parent=1 // pred_check
      _
    $region27: #{ohem_loss.1} parent=1 // pred_check_branch
      %266 = sbr.rel (0) target = $region29
    $region28: #{ohem_loss.1} parent=1 // pred_region
      %267 = dma.done [#allocation4], 32
    $region29: #{ohem_loss.1} parent=1 // pred_fallthru
      _
    %268 = vsyncpa [#allocation3], 1
    %269 = vsyncpa [#allocation6], 1
    %270 = vsyncpa [#allocation4], 1

</llo_original>
